<compile_context>
chip_gen: v7x
topology: tpu7x:2x2x1
jax: 0.10.0
libtpu: 0.0.40
codegen_flags: <defaults>
</compile_context>

<pallas_src>
import functools

import jax
import jax.numpy as jnp
from jax import lax
from jax.experimental import pallas as pl
from jax.experimental.pallas import tpu as pltpu

LANE = 128      # lane granularity (last dim)
SUBLANE = 8     # sublane granularity (second-to-last dim)


def _round_up(n, m):
    return ((n + m - 1) // m) * m


def linear_add_relu_kernel(x_ref, w_ref, b_ref, x2_ref, o_ref):
    # y = x @ W^T with W kept in [out, in] layout: contract on axis 1 of both
    # operands ("NT" matmul) — no transpose ever hits HBM.
    y = lax.dot_general(
        x_ref[...], w_ref[...],
        dimension_numbers=(((1,), (1,)), ((), ())),
        preferred_element_type=jnp.float32,
    )
    y = y + b_ref[...] + x2_ref[...]
    o_ref[...] = jnp.maximum(y, 0.0).astype(o_ref.dtype)


def prepare_params(weight, bias):
    """One-time (outside the hot path) zero-padding of the Linear parameters.

    weight: [out, in] (PyTorch layout, NOT transposed); bias: [out].
    Returns weight padded to [out_p, in_p] and bias as a [1, out_p] row.
    """
    fout, fin = weight.shape
    fout_p = _round_up(fout, LANE)
    fin_p = _round_up(fin, LANE)
    w_pad = jnp.pad(weight, ((0, fout_p - fout), (0, fin_p - fin)))
    b_pad = jnp.pad(bias, (0, fout_p - fout)).reshape(1, fout_p)
    return w_pad, b_pad


@functools.partial(jax.jit, static_argnames=())
def model_forward(x1, x2, w_pad, b_pad):
    """Hot path: pad activations to (8,128) granularity, run kernel, slice."""
    B, fin = x1.shape
    fout = x2.shape[1]
    fout_p, fin_p = w_pad.shape
    B_p = _round_up(B, SUBLANE)

    # Zero-pad activations (padding in the contraction dim contributes 0).
    x1_p = jnp.pad(x1, ((0, B_p - B), (0, fin_p - fin)))
    x2_p = jnp.pad(x2, ((0, B_p - B), (0, fout_p - fout)))

    vmem_spec = pl.BlockSpec(memory_space=pltpu.MemorySpace.VMEM)
    out_p = pl.pallas_call(
        linear_add_relu_kernel,
        out_shape=jax.ShapeDtypeStruct((B_p, fout_p), x1.dtype),
        in_specs=[vmem_spec, vmem_spec, vmem_spec, vmem_spec],
        out_specs=vmem_spec,
    )(x1_p, w_pad, b_pad, x2_p)

    return out_p[:B, :fout]


if __name__ == "__main__":
    key = jax.random.PRNGKey(0)
    k1, k2, k3, k4 = jax.random.split(key, 4)

    B, F = 1, 10
    # Deterministic "nn.Linear(10, 10)" parameters (synthetic, no checkpoint).
    bound = 1.0 / jnp.sqrt(F)
    weight = jax.random.uniform(k1, (F, F), jnp.float32, -bound, bound)  # [out, in]
    bias = jax.random.uniform(k2, (F,), jnp.float32, -bound, bound)

    x1 = jax.random.normal(k3, (B, F), jnp.float32)
    x2 = jax.random.normal(k4, (B, F), jnp.float32)

    # One-time parameter preparation (kept out of the per-call hot path).
    w_pad, b_pad = prepare_params(weight, bias)

    out = model_forward(x1, x2, w_pad, b_pad)
    jax.block_until_ready(out)

    # Sanity check vs pure-JAX reference (PyTorch semantics: x @ W^T + b).
    ref = jnp.maximum(x1 @ weight.T + bias + x2, 0.0)
    assert out.shape == (B, F)
    assert jnp.allclose(out, ref, atol=1e-5, rtol=1e-5)

    print("KERNEL_OK")
</pallas_src>

<mosaic_0001>
module attributes {stable_mosaic.version = 11 : i64} {
  func.func @linear_add_relu_kernel(%arg0: memref<8x128xf32, #tpu.memory_space<vmem>>, %arg1: memref<128x128xf32, #tpu.memory_space<vmem>>, %arg2: memref<1x128xf32, #tpu.memory_space<vmem>>, %arg3: memref<8x128xf32, #tpu.memory_space<vmem>>, %arg4: memref<8x128xf32, #tpu.memory_space<vmem>>) attributes {dimension_semantics = [], scalar_prefetch = 0 : i64, scratch_operands = 0 : i64, tpu.core_type = #tpu.core_type<tc>} {
    %c0 = arith.constant 0 : index
    %c0_0 = arith.constant 0 : index
    %0 = vector.load %arg0[%c0, %c0_0] : memref<8x128xf32, #tpu.memory_space<vmem>>, vector<8x128xf32>
    %c0_1 = arith.constant 0 : index
    %c0_2 = arith.constant 0 : index
    %1 = vector.load %arg1[%c0_1, %c0_2] : memref<128x128xf32, #tpu.memory_space<vmem>>, vector<128x128xf32>
    %cst = arith.constant dense<0.000000e+00> : vector<8x128xf32>
    %2 = tpu.matmul %0, %1, %cst {dimension_numbers = #tpu.dot_dimension_numbers<[1], [1], [0], [0], [0, 0, 1, 0], [], []>} : vector<8x128xf32>, vector<128x128xf32>, vector<8x128xf32> -> vector<8x128xf32>
    %c0_3 = arith.constant 0 : index
    %c0_4 = arith.constant 0 : index
    %3 = vector.load %arg2[%c0_3, %c0_4] : memref<1x128xf32, #tpu.memory_space<vmem>>, vector<1x128xf32>
    %4 = vector.broadcast %3 : vector<1x128xf32> to vector<8x128xf32>
    %5 = arith.addf %2, %4 : vector<8x128xf32>
    %c0_5 = arith.constant 0 : index
    %c0_6 = arith.constant 0 : index
    %6 = vector.load %arg3[%c0_5, %c0_6] : memref<8x128xf32, #tpu.memory_space<vmem>>, vector<8x128xf32>
    %7 = arith.addf %5, %6 : vector<8x128xf32>
    %cst_7 = arith.constant 0.000000e+00 : f32
    %8 = vector.broadcast %cst_7 : f32 to vector<8x128xf32>
    %9 = arith.maximumf %7, %8 : vector<8x128xf32>
    %c0_8 = arith.constant 0 : index
    %c0_9 = arith.constant 0 : index
    %10 = vector.load %arg4[%c0_8, %c0_9] : memref<8x128xf32, #tpu.memory_space<vmem>>, vector<8x128xf32>
    tpu.vector_store %arg4[%c0_8, %c0_9], %9 {strides = array<i32>} : memref<8x128xf32, #tpu.memory_space<vmem>>, vector<8x128xf32>,
    return
  }
}

</mosaic_0001>

<llo_original>
// kernel: model_forward.1
$region0: #{model_forward.1}
  #allocation0 [shape = 'u32[]', space=smem, size = 0x4, offset = 0x4, fixed_abs, tag = 'smem constant byte address 0x4 - core index']
  #allocation1 [shape = 'u32[144,128]{1,0:T(1,128)}', space=vmem, size = 0x12000, scoped, tag = 'internal scratch']
  %s0 = inlined_call_operand.vmem [shape: f32[8,128], index: 0, kind: input, shape index: {}]
  %s1 = inlined_call_operand.hbm [shape: f32[128,128], index: 1, kind: input, shape index: {}]
  %s2 = inlined_call_operand.vmem [shape: f32[1,128], index: 2, kind: input, shape index: {}]
  %s3 = inlined_call_operand.vmem [shape: f32[8,128], index: 3, kind: input, shape index: {}]
  %s4 = inlined_call_operand.vmem [shape: f32[8,128], index: 4, kind: output, shape index: {}]
  %s5 = sld [smem:[#allocation0]]
  $region30: #{model_forward.1} parent=0
    _
  %s7 = ssub.s32 1, %s5
  %s8 = scalar_select 0, %s7, %s5
  $region1: #{model_forward.1} parent=0
    #allocation2 [shape = 'u8[65536]{0}', space=vmem, size = 0x10000, scoped, tag = 'input window, operand 1, single buffered']
    #allocation3 [shape = 's32[1]{0}', space=sflag, size = 0x4, scoped, tag = 'scoped memory for model_forward.1']
    %9 = vsyncpa [#allocation3], 0
    // Predicated region
    $region2: #{model_forward.1} parent=1 // pred_check
      _
    $region3: #{model_forward.1} parent=1 // pred_check_branch
      %11 = sbr.rel (0) target = $region5
    $region4: #{model_forward.1} parent=1 // pred_region
      _
    $region5: #{model_forward.1} parent=1 // pred_fallthru
      _
    // Predicated region
    $region6: #{model_forward.1} parent=1 // pred_check
      _
    $region7: #{model_forward.1} parent=1 // pred_check_branch
      %13 = sbr.rel (0) target = $region9
    $region8: #{model_forward.1} parent=1 // pred_region
      %s15 = ssub.s32 2048, 2048
      %16 = vsyncadd [#allocation3], %s15
      %s17 = sshll.u32 [#allocation2], 4
      %s18 = int_to_ptr.vmem [resolvable:$true] %s17
      %23 = dma.hbm_to_vmem [thread:$0]  %s1, 2048, %s18, [#allocation3], 128, 128, 8
    $region9: #{model_forward.1} parent=1 // pred_fallthru
      _
    // Predicated region
    $region10: #{model_forward.1} parent=1 // pred_check
      _
    $region11: #{model_forward.1} parent=1 // pred_check_branch
      %25 = sbr.rel (0) target = $region13
    $region12: #{model_forward.1} parent=1 // pred_region
      _
    $region13: #{model_forward.1} parent=1 // pred_fallthru
      _
    // Predicated region
    $region14: #{model_forward.1} parent=1 // pred_check
      _
    $region15: #{model_forward.1} parent=1 // pred_check_branch
      %27 = sbr.rel (0) target = $region17
    $region16: #{model_forward.1} parent=1 // pred_region
      _
    $region17: #{model_forward.1} parent=1 // pred_fallthru
      _
    // Predicated region
    $region18: #{model_forward.1} parent=1 // pred_check
      _
    $region19: #{model_forward.1} parent=1 // pred_check_branch
      %29 = sbr.rel (0) target = $region21
    $region20: #{model_forward.1} parent=1 // pred_region
      %30 = dma.done [#allocation3], 2048
    $region21: #{model_forward.1} parent=1 // pred_fallthru
      _
    %v31 = vld [vmem:[%s0] sm:$0xff]
    %v32 = vld [vmem:[#allocation2] sm:$0xff]
    %v33 = vld [vmem:[#allocation2 + $0x8] sm:$0xff]
    %v34 = vld [vmem:[#allocation2 + $0x10] sm:$0xff]
    %v35 = vld [vmem:[#allocation2 + $0x18] sm:$0xff]
    %v36 = vld [vmem:[#allocation2 + $0x20] sm:$0xff]
    %v37 = vld [vmem:[#allocation2 + $0x28] sm:$0xff]
    %v38 = vld [vmem:[#allocation2 + $0x30] sm:$0xff]
    %v39 = vld [vmem:[#allocation2 + $0x38] sm:$0xff]
    %v40 = vld [vmem:[#allocation2 + $0x40] sm:$0xff]
    %v41 = vld [vmem:[#allocation2 + $0x48] sm:$0xff]
    %v42 = vld [vmem:[#allocation2 + $0x50] sm:$0xff]
    %v43 = vld [vmem:[#allocation2 + $0x58] sm:$0xff]
    %v44 = vld [vmem:[#allocation2 + $0x60] sm:$0xff]
    %v45 = vld [vmem:[#allocation2 + $0x68] sm:$0xff]
    %v46 = vld [vmem:[#allocation2 + $0x70] sm:$0xff]
    %v47 = vld [vmem:[#allocation2 + $0x78] sm:$0xff]
    %v48 = vld [vmem:[%s2] sm:$0x1]
    %v50 = vlaneseq
    %v51 = vshrl.u32 %v50, 7
    %v52 = vsub.s32 0, %v51
    %v53 = vrot.slane %v48, %v52
    %55 = vmatprep.subr.mxu0 0.0
    %56 = vmatpush1.xpose.msra.mxu0 %v32
    %57 = vmatprep.subr.mxu0 0.0
    %58 = vmatpush1.xpose.msra.mxu0 %v33
    %59 = vmatprep.subr.mxu0 0.0
    %60 = vmatpush1.xpose.msra.mxu0 %v34
    %61 = vmatprep.subr.mxu0 0.0
    %62 = vmatpush1.xpose.msra.mxu0 %v35
    %63 = vmatprep.subr.mxu0 0.0
    %64 = vmatpush1.xpose.msra.mxu0 %v36
    %65 = vmatprep.subr.mxu0 0.0
    %66 = vmatpush1.xpose.msra.mxu0 %v37
    %67 = vmatprep.subr.mxu0 0.0
    %68 = vmatpush1.xpose.msra.mxu0 %v38
    %69 = vmatprep.subr.mxu0 0.0
    %70 = vmatpush1.xpose.msra.mxu0 %v39
    %71 = vmatprep.subr.mxu0 0.0
    %72 = vmatpush1.xpose.msra.mxu0 %v40
    %73 = vmatprep.subr.mxu0 0.0
    %74 = vmatpush1.xpose.msra.mxu0 %v41
    %75 = vmatprep.subr.mxu0 0.0
    %76 = vmatpush1.xpose.msra.mxu0 %v42
    %77 = vmatprep.subr.mxu0 0.0
    %78 = vmatpush1.xpose.msra.mxu0 %v43
    %79 = vmatprep.subr.mxu0 0.0
    %80 = vmatpush1.xpose.msra.mxu0 %v44
    %81 = vmatprep.subr.mxu0 0.0
    %82 = vmatpush1.xpose.msra.mxu0 %v45
    %83 = vmatprep.subr.mxu0 0.0
    %84 = vmatpush1.xpose.msra.mxu0 %v46
    %85 = vmatprep.subr.mxu0 0.0
    %86 = vmatpush1.xpose.msra.mxu0 %v47
    %87 = vmatprep.subr.mxu0 0.0
    %88 = vmatpush1.xpose.msra.mxu0 0.0
    %89 = vmatprep.subr.mxu0 0.0
    %90 = vmatpush1.xpose.msra.mxu0 0.0
    %91 = vmatprep.subr.mxu0 0.0
    %92 = vmatpush1.xpose.msra.mxu0 0.0
    %93 = vmatprep.subr.mxu0 0.0
    %94 = vmatpush1.xpose.msra.mxu0 0.0
    %95 = vmatprep.subr.mxu0 0.0
    %96 = vmatpush1.xpose.msra.mxu0 0.0
    %97 = vmatprep.subr.mxu0 0.0
    %98 = vmatpush1.xpose.msra.mxu0 0.0
    %99 = vmatprep.subr.mxu0 0.0
    %100 = vmatpush1.xpose.msra.mxu0 0.0
    %101 = vmatprep.subr.mxu0 0.0
    %102 = vmatpush1.xpose.msra.mxu0 0.0
    %103 = vmatprep.subr.mxu0 0.0
    %104 = vmatpush1.xpose.msra.mxu0 0.0
    %105 = vmatprep.subr.mxu0 0.0
    %106 = vmatpush1.xpose.msra.mxu0 0.0
    %107 = vmatprep.subr.mxu0 0.0
    %108 = vmatpush1.xpose.msra.mxu0 0.0
    %109 = vmatprep.subr.mxu0 0.0
    %110 = vmatpush1.xpose.msra.mxu0 0.0
    %111 = vmatprep.subr.mxu0 0.0
    %112 = vmatpush1.xpose.msra.mxu0 0.0
    %113 = vmatprep.subr.mxu0 0.0
    %114 = vmatpush1.xpose.msra.mxu0 0.0
    %115 = vmatprep.subr.mxu0 0.0
    %116 = vmatpush1.xpose.msra.mxu0 0.0
    %117 = vmatprep.subr.mxu0 0.0
    %118 = vmatpush1.xpose.msra.mxu0 0.0
    %119 = vmatprep.mubr.f32.mxu0 0.0
    %120 = vmatmul.mubr.f32.gmra.mrb[0].mxu0 %v31
    %v121 = vpop.f32.mrb[0].mxu0
    %v122 = vadd.f32 %v53, %v121
    %v123 = vpop.f32.mrb[0].mxu0
    %124 = vdwg.mxu0
    %v125 = vld [vmem:[%s3] sm:$0xff]
    %v126 = vadd.f32 %v122, %v125
    %v127 = vmax.f32 %v126, 0.0
    %128 = vst [vmem:[%s4] sm:$0xff] %v127
    // Predicated region
    $region22: #{model_forward.1} parent=1 // pred_check
      _
    $region23: #{model_forward.1} parent=1 // pred_check_branch
      %130 = sbr.rel (0) target = $region25
    $region24: #{model_forward.1} parent=1 // pred_region
      _
    $region25: #{model_forward.1} parent=1 // pred_fallthru
      _
    // Predicated region
    $region26: #{model_forward.1} parent=1 // pred_check
      _
    $region27: #{model_forward.1} parent=1 // pred_check_branch
      %132 = sbr.rel (0) target = $region29
    $region28: #{model_forward.1} parent=1 // pred_region
      _
    $region29: #{model_forward.1} parent=1 // pred_fallthru
      _
    %133 = vsyncpa [#allocation3], 1

</llo_original>
